<compile_context>
chip_gen: v7x
topology: tpu7x:2x2x1
jax: 0.10.0
libtpu: 0.0.40
codegen_flags: <defaults>
</compile_context>

<pallas_src>
import jax
import jax.numpy as jnp
from jax.experimental import pallas as pl
from jax.experimental.pallas import tpu as pltpu


def _ratio_kernel(x1_ref, x2_ref, w1a_ref, w1b_ref, b1_ref, w2_ref, b2_ref, o_ref):
    # x1_ref, x2_ref: (TR, 128) f32     w1a_ref, w1b_ref: (128, 128) bf16
    # b1_ref: (1, 128) f32              w2_ref: (128, P) bf16
    # b2_ref: (1, 1) f32 in SMEM        o_ref: (TR, P) f32
    x1b = x1_ref[...].astype(jnp.bfloat16)
    x2b = x2_ref[...].astype(jnp.bfloat16)
    h = jnp.tanh(
        jnp.dot(x1b, w1a_ref[...], preferred_element_type=jnp.float32)
        + jnp.dot(x2b, w1b_ref[...], preferred_element_type=jnp.float32)
        + b1_ref[...]
    )  # (TR, 128) f32 -- 8 tokens per row, 16 features each
    # Second layer: the (128, P) block matrix contracts each token's 16-lane
    # feature segment against w2, landing the per-token scalar at column
    # (token slot).  No transpose/relayout of h is required.
    z = jnp.dot(h.astype(jnp.bfloat16), w2_ref[...],
                preferred_element_type=jnp.float32)  # (TR, P)
    o_ref[...] = jax.nn.sigmoid(z + b2_ref[0, 0]).astype(o_ref.dtype)


def _round_up(x, m):
    return (x + m - 1) // m * m


def a2_ratio_forward(x1, x2, w1, b1, w2, b2, *, tile_tokens=16384):
    """x1, x2: (B, S, window) float32.

    Weights stored as (in, out): w1 (2W, W), b1 (1, W), w2 (W, 1), b2 (1, 1).
    Returns sigmoid(tanh([x1,x2] @ w1 + b1) @ w2 + b2) with all size-1 dims
    squeezed (matching torch's .squeeze()).
    """
    B, S, W = x1.shape
    assert x2.shape == (B, S, W)
    assert W <= 128 and 128 % W == 0, "packed kernel requires window | 128"
    # TODO(synk): lane-padded fallback for window sizes that do not divide 128.
    P = 128 // W          # tokens packed per 128-lane row
    N = B * S

    x1_2d = x1.reshape(N, W)
    x2_2d = x2.reshape(N, W)

    n_pack = _round_up(max(N, 1), P)
    if n_pack != N:
        # Rare path (<= P-1 dummy tokens): only needed so the zero-copy
        # (N, W) -> (N/P, 128) view exists.  This is the only input copy.
        pad = ((0, n_pack - N), (0, 0))
        x1_2d = jnp.pad(x1_2d, pad)
        x2_2d = jnp.pad(x2_2d, pad)
    rows = n_pack // P
    x1_p = x1_2d.reshape(rows, 128)   # zero-copy, row-major: row r holds tokens rP..rP+P-1
    x2_p = x2_2d.reshape(rows, 128)

    # Block-diagonal weights so the packed layout does per-token matmuls.
    eye_p = jnp.eye(P, dtype=jnp.float32)
    w1a_blk = jnp.kron(eye_p, w1[:W]).astype(jnp.bfloat16)           # (128, 128)
    w1b_blk = jnp.kron(eye_p, w1[W:]).astype(jnp.bfloat16)           # (128, 128)
    w2_blk = jnp.kron(eye_p, w2.reshape(W, 1)).astype(jnp.bfloat16)  # (128, P)
    b1_tiled = jnp.tile(b1.reshape(1, W), (1, P)).astype(jnp.float32)  # (1, 128)
    b2_s = b2.reshape(1, 1).astype(jnp.float32)                        # SMEM scalar

    # Row-tile size (in packed rows): multiple of 8 (sublane) unless it covers
    # the whole array; split into >= 2 grid steps when there is enough work so
    # the 'parallel' axis shards across both v7x TensorCores.
    cap = _round_up(max(tile_tokens // P, 8), 8)
    if rows <= 256:
        tr = rows
    else:
        tr = min(cap, _round_up(pl.cdiv(rows, 2), 8))
    grid = (pl.cdiv(rows, tr),)

    out = pl.pallas_call(
        _ratio_kernel,
        out_shape=jax.ShapeDtypeStruct((rows, P), jnp.float32),
        grid_spec=pltpu.PrefetchScalarGridSpec(
            num_scalar_prefetch=0,
            grid=grid,
            in_specs=[
                pl.BlockSpec((tr, 128), lambda i: (i, 0)),    # packed x1 tile
                pl.BlockSpec((tr, 128), lambda i: (i, 0)),    # packed x2 tile
                pl.BlockSpec((128, 128), lambda i: (0, 0)),   # W1a block-diag (resident)
                pl.BlockSpec((128, 128), lambda i: (0, 0)),   # W1b block-diag (resident)
                pl.BlockSpec((1, 128), lambda i: (0, 0)),     # b1 tiled
                pl.BlockSpec((128, P), lambda i: (0, 0)),     # W2 block matrix
                pl.BlockSpec(memory_space=pltpu.MemorySpace.SMEM),  # b2 scalar
            ],
            out_specs=pl.BlockSpec((tr, P), lambda i: (i, 0)),
        ),
        compiler_params=pltpu.CompilerParams(
            dimension_semantics=("parallel",),
        ),
    )(x1_p, x2_p, w1a_blk, w1b_blk, b1_tiled, w2_blk, b2_s)

    # (rows, P) row-major flatten restores original token order.
    res = out.reshape(-1)[:N].reshape(B, S, 1)
    # torch's r.squeeze() drops ALL size-1 dims (e.g. B==1 or S==1 too).
    return jnp.squeeze(res)


def init_params(window, key):
    """Deterministic init mimicking nn.Linear shapes (stored as (in, out))."""
    k1, k2, k3, k4 = jax.random.split(key, 4)
    in1, out1 = 2 * window, window
    in2, out2 = window, 1
    lim1 = 1.0 / jnp.sqrt(in1)
    lim2 = 1.0 / jnp.sqrt(in2)
    w1 = jax.random.uniform(k1, (in1, out1), jnp.float32, -lim1, lim1)
    b1 = jax.random.uniform(k2, (1, out1), jnp.float32, -lim1, lim1)
    w2 = jax.random.uniform(k3, (in2, out2), jnp.float32, -lim2, lim2)
    b2 = jax.random.uniform(k4, (1, out2), jnp.float32, -lim2, lim2)
    return w1, b1, w2, b2


if __name__ == "__main__":
    window = 16
    B, S = 2, 8

    key = jax.random.PRNGKey(0)
    kx1, kx2, kp = jax.random.split(key, 3)
    x1 = jax.random.normal(kx1, (B, S, window), jnp.float32)
    x2 = jax.random.normal(kx2, (B, S, window), jnp.float32)
    w1, b1, w2, b2 = init_params(window, kp)

    out = jax.jit(a2_ratio_forward)(x1, x2, w1, b1, w2, b2)
    out = jax.block_until_ready(out)

    # Pure-JAX f32 reference (kernel uses bf16 matmul operands, so allow ~1e-3).
    x = jnp.concatenate([x1, x2], axis=2).reshape(B * S, 2 * window)
    ref = jax.nn.sigmoid(jnp.tanh(x @ w1 + b1) @ w2 + b2).reshape(B, S)
    assert out.shape == (B, S), f"bad shape {out.shape}"
    err = jnp.max(jnp.abs(out - ref))
    assert jnp.allclose(out, ref, atol=5e-3), f"mismatch vs reference (max err {err})"

    print("KERNEL_OK")
</pallas_src>

<mosaic_0001>
module attributes {stable_mosaic.version = 11 : i64} {
  func.func @_ratio_kernel(%arg0: i32, %arg1: memref<2x128xf32, #tpu.memory_space<vmem>>, %arg2: memref<2x128xf32, #tpu.memory_space<vmem>>, %arg3: memref<128x128xbf16, #tpu.memory_space<vmem>>, %arg4: memref<128x128xbf16, #tpu.memory_space<vmem>>, %arg5: memref<1x128xf32, #tpu.memory_space<vmem>>, %arg6: memref<128x8xbf16, #tpu.memory_space<vmem>>, %arg7: memref<1x1xf32, #tpu.memory_space<smem>>, %arg8: memref<2x8xf32, #tpu.memory_space<vmem>>) attributes {dimension_semantics = [#tpu.dimension_semantics<parallel>], iteration_bounds = array<i64: 1>, scalar_prefetch = 0 : i64, scratch_operands = 0 : i64, tpu.core_type = #tpu.core_type<tc>, window_params = [{transform_indices = @transform_0, window_bounds = array<i64: 2, 128>}, {transform_indices = @transform_1, window_bounds = array<i64: 2, 128>}, {pipeline_mode = #tpu.pipeline_mode<synchronous>, transform_indices = @transform_2, window_bounds = array<i64: 128, 128>}, {pipeline_mode = #tpu.pipeline_mode<synchronous>, transform_indices = @transform_3, window_bounds = array<i64: 128, 128>}, {pipeline_mode = #tpu.pipeline_mode<synchronous>, transform_indices = @transform_4, window_bounds = array<i64: 1, 128>}, {pipeline_mode = #tpu.pipeline_mode<synchronous>, transform_indices = @transform_5, window_bounds = array<i64: 128, 8>}, {transform_indices = @transform_6, window_bounds = array<i64: 1, 1>}, {transform_indices = @transform_7, window_bounds = array<i64: 2, 8>}]} {
    %c0 = arith.constant 0 : index
    %c0_0 = arith.constant 0 : index
    %0 = vector.load %arg1[%c0, %c0_0] : memref<2x128xf32, #tpu.memory_space<vmem>>, vector<2x128xf32>
    %1 = arith.truncf %0 : vector<2x128xf32> to vector<2x128xbf16>
    %c0_1 = arith.constant 0 : index
    %c0_2 = arith.constant 0 : index
    %2 = vector.load %arg2[%c0_1, %c0_2] : memref<2x128xf32, #tpu.memory_space<vmem>>, vector<2x128xf32>
    %3 = arith.truncf %2 : vector<2x128xf32> to vector<2x128xbf16>
    %c0_3 = arith.constant 0 : index
    %c0_4 = arith.constant 0 : index
    %4 = vector.load %arg3[%c0_3, %c0_4] : memref<128x128xbf16, #tpu.memory_space<vmem>>, vector<128x128xbf16>
    %cst = arith.constant dense<0.000000e+00> : vector<2x128xf32>
    %5 = tpu.matmul %1, %4, %cst {dimension_numbers = #tpu.dot_dimension_numbers<[1], [0], [0], [1], [0, 0, 1, 1], [], []>} : vector<2x128xbf16>, vector<128x128xbf16>, vector<2x128xf32> -> vector<2x128xf32>
    %c0_5 = arith.constant 0 : index
    %c0_6 = arith.constant 0 : index
    %6 = vector.load %arg4[%c0_5, %c0_6] : memref<128x128xbf16, #tpu.memory_space<vmem>>, vector<128x128xbf16>
    %cst_7 = arith.constant dense<0.000000e+00> : vector<2x128xf32>
    %7 = tpu.matmul %3, %6, %cst_7 {dimension_numbers = #tpu.dot_dimension_numbers<[1], [0], [0], [1], [0, 0, 1, 1], [], []>} : vector<2x128xbf16>, vector<128x128xbf16>, vector<2x128xf32> -> vector<2x128xf32>
    %8 = arith.addf %5, %7 : vector<2x128xf32>
    %c0_8 = arith.constant 0 : index
    %c0_9 = arith.constant 0 : index
    %9 = vector.load %arg5[%c0_8, %c0_9] : memref<1x128xf32, #tpu.memory_space<vmem>>, vector<1x128xf32>
    %10 = vector.broadcast %9 : vector<1x128xf32> to vector<2x128xf32>
    %11 = arith.addf %8, %10 : vector<2x128xf32>
    %12 = math.tanh %11 : vector<2x128xf32>
    %13 = arith.truncf %12 : vector<2x128xf32> to vector<2x128xbf16>
    %c0_10 = arith.constant 0 : index
    %c0_11 = arith.constant 0 : index
    %14 = vector.load %arg6[%c0_10, %c0_11] : memref<128x8xbf16, #tpu.memory_space<vmem>>, vector<128x8xbf16>
    %cst_12 = arith.constant dense<0.000000e+00> : vector<2x8xf32>
    %15 = tpu.matmul %13, %14, %cst_12 {dimension_numbers = #tpu.dot_dimension_numbers<[1], [0], [0], [1], [0, 0, 1, 1], [], []>} : vector<2x128xbf16>, vector<128x8xbf16>, vector<2x8xf32> -> vector<2x8xf32>
    %c0_13 = arith.constant 0 : index
    %c0_14 = arith.constant 0 : index
    %16 = memref.load %arg7[%c0_13, %c0_14] : memref<1x1xf32, #tpu.memory_space<smem>>
    %17 = vector.broadcast %16 : f32 to vector<2x8xf32>
    %18 = arith.addf %15, %17 : vector<2x8xf32>
    %19 = arith.negf %18 : vector<2x8xf32>
    %20 = math.exp %19 : vector<2x8xf32>
    %cst_15 = arith.constant 1.000000e+00 : f32
    %21 = vector.broadcast %cst_15 : f32 to vector<2x8xf32>
    %22 = arith.addf %21, %20 : vector<2x8xf32>
    %23 = arith.divf %21, %22 : vector<2x8xf32>
    %c0_16 = arith.constant 0 : index
    %c0_17 = arith.constant 0 : index
    %24 = vector.load %arg8[%c0_16, %c0_17] : memref<2x8xf32, #tpu.memory_space<vmem>>, vector<2x8xf32>
    tpu.vector_store %arg8[%c0_16, %c0_17], %23 {strides = array<i32>} : memref<2x8xf32, #tpu.memory_space<vmem>>, vector<2x8xf32>,
    return
  }
  func.func @transform_0(%arg0: i32) -> (i32, i32) {
    %c0_i32 = arith.constant 0 : i32
    %c0_i32_0 = arith.constant 0 : i32
    return %arg0, %c0_i32 : i32, i32
  }
  func.func @transform_1(%arg0: i32) -> (i32, i32) {
    %c0_i32 = arith.constant 0 : i32
    %c0_i32_0 = arith.constant 0 : i32
    return %arg0, %c0_i32 : i32, i32
  }
  func.func @transform_2(%arg0: i32) -> (i32, i32) {
    %c0_i32 = arith.constant 0 : i32
    %c0_i32_0 = arith.constant 0 : i32
    %c0_i32_1 = arith.constant 0 : i32
    return %c0_i32, %c0_i32_0 : i32, i32
  }
  func.func @transform_3(%arg0: i32) -> (i32, i32) {
    %c0_i32 = arith.constant 0 : i32
    %c0_i32_0 = arith.constant 0 : i32
    %c0_i32_1 = arith.constant 0 : i32
    return %c0_i32, %c0_i32_0 : i32, i32
  }
  func.func @transform_4(%arg0: i32) -> (i32, i32) {
    %c0_i32 = arith.constant 0 : i32
    %c0_i32_0 = arith.constant 0 : i32
    %c0_i32_1 = arith.constant 0 : i32
    return %c0_i32, %c0_i32_0 : i32, i32
  }
  func.func @transform_5(%arg0: i32) -> (i32, i32) {
    %c0_i32 = arith.constant 0 : i32
    %c0_i32_0 = arith.constant 0 : i32
    %c0_i32_1 = arith.constant 0 : i32
    return %c0_i32, %c0_i32_0 : i32, i32
  }
  func.func @transform_6(%arg0: i32) -> (i32, i32) {
    %c0_i32 = arith.constant 0 : i32
    %c0_i32_0 = arith.constant 0 : i32
    %c0_i32_1 = arith.constant 0 : i32
    return %c0_i32, %c0_i32_0 : i32, i32
  }
  func.func @transform_7(%arg0: i32) -> (i32, i32) {
    %c0_i32 = arith.constant 0 : i32
    %c0_i32_0 = arith.constant 0 : i32
    return %arg0, %c0_i32 : i32, i32
  }
}

</mosaic_0001>

<llo_original>
// kernel: a2_ratio_forward.1
$region0: #{a2_ratio_forward.1}
  #allocation0 [shape = 'u32[]', space=smem, size = 0x4, offset = 0x4, fixed_abs, tag = 'smem constant byte address 0x4 - core index']
  #allocation1 [shape = 'u32[144,128]{1,0:T(1,128)}', space=vmem, size = 0x12000, scoped, tag = 'internal scratch']
  #allocation2 [shape = 'f32[1,1]{1,0:T(1,128)S(6)}', space=smem, size = 0x200, scoped, tag = 'scoped memory for a2_ratio_forward.1']
  %s0 = inlined_call_operand.vmem [shape: f32[2,128], index: 0, kind: input, shape index: {}]
  %s1 = inlined_call_operand.vmem [shape: f32[2,128], index: 1, kind: input, shape index: {}]
  %s2 = inlined_call_operand.vmem [shape: bf16[128,128], index: 2, kind: input, shape index: {}]
  %s3 = inlined_call_operand.vmem [shape: bf16[128,128], index: 3, kind: input, shape index: {}]
  %s4 = inlined_call_operand.vmem [shape: f32[1,128], index: 4, kind: input, shape index: {}]
  %s5 = inlined_call_operand.vmem [shape: bf16[128,8], index: 5, kind: input, shape index: {}]
  %s6 = inlined_call_operand.<no memory space> [shape: f32[1,1], index: 6, kind: input, shape index: {}]
  %s7 = inlined_call_operand.hbm [shape: f32[2,8], index: 7, kind: output, shape index: {}]
  %s8 = sld [smem:[#allocation0]]
  $region38: #{a2_ratio_forward.1} parent=0
    _
  %s10 = ssub.s32 1, %s8
  %s11 = scalar_select 0, %s10, %s8
  %12 = sst [smem:[#allocation2]] %s6
  $region1: #{a2_ratio_forward.1} parent=0
    #allocation3 [shape = 'u8[1024]{0}', space=vmem, size = 0x400, scoped, tag = 'output window, operand 0, single buffered']
    #allocation4 [shape = 's32[1]{0}', space=sflag, size = 0x4, scoped, tag = 'scoped memory for a2_ratio_forward.1']
    %13 = vsyncpa [#allocation4], 0
    // Predicated region
    $region2: #{a2_ratio_forward.1} parent=1 // pred_check
      _
    $region3: #{a2_ratio_forward.1} parent=1 // pred_check_branch
      %15 = sbr.rel (0) target = $region5
    $region4: #{a2_ratio_forward.1} parent=1 // pred_region
      _
    $region5: #{a2_ratio_forward.1} parent=1 // pred_fallthru
      _
    // Predicated region
    $region6: #{a2_ratio_forward.1} parent=1 // pred_check
      _
    $region7: #{a2_ratio_forward.1} parent=1 // pred_check_branch
      %17 = sbr.rel (0) target = $region9
    $region8: #{a2_ratio_forward.1} parent=1 // pred_region
      _
    $region9: #{a2_ratio_forward.1} parent=1 // pred_fallthru
      _
    // Predicated region
    $region10: #{a2_ratio_forward.1} parent=1 // pred_check
      _
    $region11: #{a2_ratio_forward.1} parent=1 // pred_check_branch
      %19 = sbr.rel (0) target = $region13
    $region12: #{a2_ratio_forward.1} parent=1 // pred_region
      _
    $region13: #{a2_ratio_forward.1} parent=1 // pred_fallthru
      _
    // Predicated region
    $region14: #{a2_ratio_forward.1} parent=1 // pred_check
      _
    $region15: #{a2_ratio_forward.1} parent=1 // pred_check_branch
      %21 = sbr.rel (0) target = $region17
    $region16: #{a2_ratio_forward.1} parent=1 // pred_region
      _
    $region17: #{a2_ratio_forward.1} parent=1 // pred_fallthru
      _
    // Predicated region
    $region18: #{a2_ratio_forward.1} parent=1 // pred_check
      _
    $region19: #{a2_ratio_forward.1} parent=1 // pred_check_branch
      %23 = sbr.rel (0) target = $region21
    $region20: #{a2_ratio_forward.1} parent=1 // pred_region
      _
    $region21: #{a2_ratio_forward.1} parent=1 // pred_fallthru
      _
    // Predicated region
    $region22: #{a2_ratio_forward.1} parent=1 // pred_check
      _
    $region23: #{a2_ratio_forward.1} parent=1 // pred_check_branch
      %25 = sbr.rel (0) target = $region25
    $region24: #{a2_ratio_forward.1} parent=1 // pred_region
      _
    $region25: #{a2_ratio_forward.1} parent=1 // pred_fallthru
      _
    // Predicated region
    $region26: #{a2_ratio_forward.1} parent=1 // pred_check
      _
    $region27: #{a2_ratio_forward.1} parent=1 // pred_check_branch
      %27 = sbr.rel (0) target = $region29
    $region28: #{a2_ratio_forward.1} parent=1 // pred_region
      _
    $region29: #{a2_ratio_forward.1} parent=1 // pred_fallthru
      _
    %v29 = vld [vmem:[%s0] sm:$0x3]
    %v30 = vpack.c.bf16 %v29, %v29
    %v31 = vld [vmem:[%s1] sm:$0x3]
    %v32 = vpack.c.bf16 %v31, %v31
    %v33 = vld [vmem:[%s2] sm:$0xf]
    %v34 = vld [vmem:[%s2 + $0x4] sm:$0xf]
    %v35 = vld [vmem:[%s2 + $0x8] sm:$0xf]
    %v36 = vld [vmem:[%s2 + $0xc] sm:$0xf]
    %v37 = vld [vmem:[%s2 + $0x10] sm:$0xf]
    %v38 = vld [vmem:[%s2 + $0x14] sm:$0xf]
    %v39 = vld [vmem:[%s2 + $0x18] sm:$0xf]
    %v40 = vld [vmem:[%s2 + $0x1c] sm:$0xf]
    %v41 = vld [vmem:[%s2 + $0x20] sm:$0xf]
    %v42 = vld [vmem:[%s2 + $0x24] sm:$0xf]
    %v43 = vld [vmem:[%s2 + $0x28] sm:$0xf]
    %v44 = vld [vmem:[%s2 + $0x2c] sm:$0xf]
    %v45 = vld [vmem:[%s2 + $0x30] sm:$0xf]
    %v46 = vld [vmem:[%s2 + $0x34] sm:$0xf]
    %v47 = vld [vmem:[%s2 + $0x38] sm:$0xf]
    %v48 = vld [vmem:[%s2 + $0x3c] sm:$0xf]
    %v49 = vld [vmem:[%s3] sm:$0xf]
    %v50 = vld [vmem:[%s3 + $0x4] sm:$0xf]
    %v51 = vld [vmem:[%s3 + $0x8] sm:$0xf]
    %v52 = vld [vmem:[%s3 + $0xc] sm:$0xf]
    %v53 = vld [vmem:[%s3 + $0x10] sm:$0xf]
    %v54 = vld [vmem:[%s3 + $0x14] sm:$0xf]
    %v55 = vld [vmem:[%s3 + $0x18] sm:$0xf]
    %v56 = vld [vmem:[%s3 + $0x1c] sm:$0xf]
    %v57 = vld [vmem:[%s3 + $0x20] sm:$0xf]
    %v58 = vld [vmem:[%s3 + $0x24] sm:$0xf]
    %v59 = vld [vmem:[%s3 + $0x28] sm:$0xf]
    %v60 = vld [vmem:[%s3 + $0x2c] sm:$0xf]
    %v61 = vld [vmem:[%s3 + $0x30] sm:$0xf]
    %v62 = vld [vmem:[%s3 + $0x34] sm:$0xf]
    %v63 = vld [vmem:[%s3 + $0x38] sm:$0xf]
    %v64 = vld [vmem:[%s3 + $0x3c] sm:$0xf]
    %v81 = vunpack.c.l.b16 %v49
    %v82 = vunpack.c.l.b16 %v50
    %v83 = vunpack.c.l.b16 %v51
    %v84 = vunpack.c.l.b16 %v52
    %v85 = vunpack.c.l.b16 %v53
    %v86 = vunpack.c.l.b16 %v54
    %v87 = vunpack.c.l.b16 %v55
    %v88 = vunpack.c.l.b16 %v56
    %v89 = vunpack.c.l.b16 %v57
    %v90 = vunpack.c.l.b16 %v58
    %v91 = vunpack.c.l.b16 %v59
    %v92 = vunpack.c.l.b16 %v60
    %v93 = vunpack.c.l.b16 %v61
    %v94 = vunpack.c.l.b16 %v62
    %v95 = vunpack.c.l.b16 %v63
    %v96 = vunpack.c.l.b16 %v64
    %v97 = vpack.c.b16 %v82, %v81
    %v98 = vpack.c.b16 %v84, %v83
    %v99 = vpack.c.b16 %v86, %v85
    %v100 = vpack.c.b16 %v88, %v87
    %v101 = vpack.c.b16 %v90, %v89
    %v102 = vpack.c.b16 %v92, %v91
    %v103 = vpack.c.b16 %v94, %v93
    %v104 = vpack.c.b16 %v96, %v95
    %113 = vmatprep.subr.bf16.mxu0 0
    %114 = vmatpush1.bf16.msra.mxu0 %v97
    %115 = vmatprep.subr.bf16.mxu0 0
    %116 = vmatpush1.bf16.msra.mxu0 %v98
    %117 = vmatprep.subr.bf16.mxu0 0
    %118 = vmatpush1.bf16.msra.mxu0 %v99
    %119 = vmatprep.subr.bf16.mxu0 0
    %120 = vmatpush1.bf16.msra.mxu0 %v100
    %121 = vmatprep.subr.bf16.mxu0 0
    %122 = vmatpush1.bf16.msra.mxu0 %v101
    %123 = vmatprep.subr.bf16.mxu0 0
    %124 = vmatpush1.bf16.msra.mxu0 %v102
    %125 = vmatprep.subr.bf16.mxu0 0
    %126 = vmatpush1.bf16.msra.mxu0 %v103
    %127 = vmatprep.subr.bf16.mxu0 0
    %128 = vmatpush1.bf16.msra.mxu0 %v104
    %129 = vmatprep.subr.bf16.mxu0 0
    %130 = vmatpush1.bf16.msra.mxu0 0
    %131 = vmatprep.subr.bf16.mxu0 0
    %132 = vmatpush1.bf16.msra.mxu0 0
    %133 = vmatprep.subr.bf16.mxu0 0
    %134 = vmatpush1.bf16.msra.mxu0 0
    %135 = vmatprep.subr.bf16.mxu0 0
    %136 = vmatpush1.bf16.msra.mxu0 0
    %137 = vmatprep.subr.bf16.mxu0 0
    %138 = vmatpush1.bf16.msra.mxu0 0
    %139 = vmatprep.subr.bf16.mxu0 0
    %140 = vmatpush1.bf16.msra.mxu0 0
    %141 = vmatprep.subr.bf16.mxu0 0
    %142 = vmatpush1.bf16.msra.mxu0 0
    %143 = vmatprep.subr.bf16.mxu0 0
    %144 = vmatpush1.bf16.msra.mxu0 0
    %145 = vmatprep.mubr.bf16.mxu0 0
    %146 = vmatmul.mubr.bf16.gmra.mrb[0].mxu0 %v32
    %v147 = vpop.f32.mrb[0].mxu0
    %v148 = vadd.f32 0.0, %v147
    %v149 = vpop.f32.mrb[0].mxu0
    %v150 = vpop.f32.mrb[0].mxu0
    %v151 = vpop.f32.mrb[0].mxu0
    %152 = vdwg.mxu0
    %v169 = vunpack.c.l.b16 %v33
    %v170 = vunpack.c.l.b16 %v34
    %v171 = vunpack.c.l.b16 %v35
    %v172 = vunpack.c.l.b16 %v36
    %v173 = vunpack.c.l.b16 %v37
    %v174 = vunpack.c.l.b16 %v38
    %v175 = vunpack.c.l.b16 %v39
    %v176 = vunpack.c.l.b16 %v40
    %v177 = vunpack.c.l.b16 %v41
    %v178 = vunpack.c.l.b16 %v42
    %v179 = vunpack.c.l.b16 %v43
    %v180 = vunpack.c.l.b16 %v44
    %v181 = vunpack.c.l.b16 %v45
    %v182 = vunpack.c.l.b16 %v46
    %v183 = vunpack.c.l.b16 %v47
    %v184 = vunpack.c.l.b16 %v48
    %v185 = vpack.c.b16 %v170, %v169
    %v186 = vpack.c.b16 %v172, %v171
    %v187 = vpack.c.b16 %v174, %v173
    %v188 = vpack.c.b16 %v176, %v175
    %v189 = vpack.c.b16 %v178, %v177
    %v190 = vpack.c.b16 %v180, %v179
    %v191 = vpack.c.b16 %v182, %v181
    %v192 = vpack.c.b16 %v184, %v183
    %201 = vmatprep.subr.bf16.mxu0 0
    %202 = vmatpush1.bf16.msra.mxu0 %v185
    %203 = vmatprep.subr.bf16.mxu0 0
    %204 = vmatpush1.bf16.msra.mxu0 %v186
    %205 = vmatprep.subr.bf16.mxu0 0
    %206 = vmatpush1.bf16.msra.mxu0 %v187
    %207 = vmatprep.subr.bf16.mxu0 0
    %208 = vmatpush1.bf16.msra.mxu0 %v188
    %209 = vmatprep.subr.bf16.mxu0 0
    %210 = vmatpush1.bf16.msra.mxu0 %v189
    %211 = vmatprep.subr.bf16.mxu0 0
    %212 = vmatpush1.bf16.msra.mxu0 %v190
    %213 = vmatprep.subr.bf16.mxu0 0
    %214 = vmatpush1.bf16.msra.mxu0 %v191
    %215 = vmatprep.subr.bf16.mxu0 0
    %216 = vmatpush1.bf16.msra.mxu0 %v192
    %217 = vmatprep.subr.bf16.mxu0 0
    %218 = vmatpush1.bf16.msra.mxu0 0
    %219 = vmatprep.subr.bf16.mxu0 0
    %220 = vmatpush1.bf16.msra.mxu0 0
    %221 = vmatprep.subr.bf16.mxu0 0
    %222 = vmatpush1.bf16.msra.mxu0 0
    %223 = vmatprep.subr.bf16.mxu0 0
    %224 = vmatpush1.bf16.msra.mxu0 0
    %225 = vmatprep.subr.bf16.mxu0 0
    %226 = vmatpush1.bf16.msra.mxu0 0
    %227 = vmatprep.subr.bf16.mxu0 0
    %228 = vmatpush1.bf16.msra.mxu0 0
    %229 = vmatprep.subr.bf16.mxu0 0
    %230 = vmatpush1.bf16.msra.mxu0 0
    %231 = vmatprep.subr.bf16.mxu0 0
    %232 = vmatpush1.bf16.msra.mxu0 0
    %233 = vmatprep.mubr.bf16.mxu0 0
    %234 = vmatmul.mubr.bf16.gmra.mrb[0].mxu0 %v30
    %v235 = vpop.f32.mrb[0].mxu0
    %v236 = vadd.f32 %v148, %v235
    %v237 = vpop.f32.mrb[0].mxu0
    %v238 = vpop.f32.mrb[0].mxu0
    %v239 = vpop.f32.mrb[0].mxu0
    %240 = vdwg.mxu0
    %v241 = vld [vmem:[%s4] sm:$0x1]
    %v243 = vlaneseq
    %v244 = vshrl.u32 %v243, 7
    %v245 = vsub.s32 0, %v244
    %v246 = vrot.slane %v241, %v245
    %v248 = vadd.f32 %v236, %v246
    %v249 = vtanh.pop %v248
    %v250 = vpack.c.bf16 %v249, %v249
    %v251 = vld [vmem:[%s5] sm:$0xf]
    %v252 = vld [vmem:[%s5 + $0x4] sm:$0xf]
    %v253 = vld [vmem:[%s5 + $0x8] sm:$0xf]
    %v254 = vld [vmem:[%s5 + $0xc] sm:$0xf]
    %v255 = vld [vmem:[%s5 + $0x10] sm:$0xf]
    %v256 = vld [vmem:[%s5 + $0x14] sm:$0xf]
    %v257 = vld [vmem:[%s5 + $0x18] sm:$0xf]
    %v258 = vld [vmem:[%s5 + $0x1c] sm:$0xf]
    %v259 = vld [vmem:[%s5 + $0x20] sm:$0xf]
    %v260 = vld [vmem:[%s5 + $0x24] sm:$0xf]
    %v261 = vld [vmem:[%s5 + $0x28] sm:$0xf]
    %v262 = vld [vmem:[%s5 + $0x2c] sm:$0xf]
    %v263 = vld [vmem:[%s5 + $0x30] sm:$0xf]
    %v264 = vld [vmem:[%s5 + $0x34] sm:$0xf]
    %v265 = vld [vmem:[%s5 + $0x38] sm:$0xf]
    %v266 = vld [vmem:[%s5 + $0x3c] sm:$0xf]
    %s267 = sld [smem:[#allocation2]]
    %v268 = vstv %s267
    %v285 = vunpack.c.l.b16 %v251
    %v286 = vunpack.c.l.b16 %v252
    %v287 = vunpack.c.l.b16 %v253
    %v288 = vunpack.c.l.b16 %v254
    %v289 = vunpack.c.l.b16 %v255
    %v290 = vunpack.c.l.b16 %v256
    %v291 = vunpack.c.l.b16 %v257
    %v292 = vunpack.c.l.b16 %v258
    %v293 = vunpack.c.l.b16 %v259
    %v294 = vunpack.c.l.b16 %v260
    %v295 = vunpack.c.l.b16 %v261
    %v296 = vunpack.c.l.b16 %v262
    %v297 = vunpack.c.l.b16 %v263
    %v298 = vunpack.c.l.b16 %v264
    %v299 = vunpack.c.l.b16 %v265
    %v300 = vunpack.c.l.b16 %v266
    %v301 = vpack.c.b16 %v286, %v285
    %v302 = vpack.c.b16 %v288, %v287
    %v303 = vpack.c.b16 %v290, %v289
    %v304 = vpack.c.b16 %v292, %v291
    %v305 = vpack.c.b16 %v294, %v293
    %v306 = vpack.c.b16 %v296, %v295
    %v307 = vpack.c.b16 %v298, %v297
    %v308 = vpack.c.b16 %v300, %v299
    %317 = vmatprep.subr.bf16.mxu0 0
    %318 = vmatpush1.bf16.msra.mxu0 %v301
    %319 = vmatprep.subr.bf16.mxu0 0
    %320 = vmatpush1.bf16.msra.mxu0 %v302
    %321 = vmatprep.subr.bf16.mxu0 0
    %322 = vmatpush1.bf16.msra.mxu0 %v303
    %323 = vmatprep.subr.bf16.mxu0 0
    %324 = vmatpush1.bf16.msra.mxu0 %v304
    %325 = vmatprep.subr.bf16.mxu0 0
    %326 = vmatpush1.bf16.msra.mxu0 %v305
    %327 = vmatprep.subr.bf16.mxu0 0
    %328 = vmatpush1.bf16.msra.mxu0 %v306
    %329 = vmatprep.subr.bf16.mxu0 0
    %330 = vmatpush1.bf16.msra.mxu0 %v307
    %331 = vmatprep.subr.bf16.mxu0 0
    %332 = vmatpush1.bf16.msra.mxu0 %v308
    %333 = vmatprep.subr.bf16.mxu0 0
    %334 = vmatpush1.bf16.msra.mxu0 0
    %335 = vmatprep.subr.bf16.mxu0 0
    %336 = vmatpush1.bf16.msra.mxu0 0
    %337 = vmatprep.subr.bf16.mxu0 0
    %338 = vmatpush1.bf16.msra.mxu0 0
    %339 = vmatprep.subr.bf16.mxu0 0
    %340 = vmatpush1.bf16.msra.mxu0 0
    %341 = vmatprep.subr.bf16.mxu0 0
    %342 = vmatpush1.bf16.msra.mxu0 0
    %343 = vmatprep.subr.bf16.mxu0 0
    %344 = vmatpush1.bf16.msra.mxu0 0
    %345 = vmatprep.subr.bf16.mxu0 0
    %346 = vmatpush1.bf16.msra.mxu0 0
    %347 = vmatprep.subr.bf16.mxu0 0
    %348 = vmatpush1.bf16.msra.mxu0 0
    %349 = vmatprep.mubr.bf16.mxu0 0
    %350 = vmatmul.mubr.bf16.gmra.mrb[0].mxu0 %v250
    %v351 = vpop.f32.mrb[0].mxu0
    %v352 = vadd.f32 %v268, %v351
    %v353 = vpop.f32.mrb[0].mxu0
    %v354 = vpop.f32.mrb[0].mxu0
    %v355 = vpop.f32.mrb[0].mxu0
    %356 = vdwg.mxu0
    %v357 = vxor.u32 %v352, 2147483648
    %v358 = vmul.f32 %v357, 1.442695
    %v359 = vpow.pop %v358
    %v360 = vadd.f32 %v359, 1.0
    %v361 = vrcp.pop %v360
    %v362 = vmul.f32 1.0, %v361
    %vm363 = vcmask 58368
    %364 = vst.msk [vmem:[#allocation3] sm:$0x3] %vm363, %v362
    // Predicated region
    $region30: #{a2_ratio_forward.1} parent=1 // pred_check
      _
    $region31: #{a2_ratio_forward.1} parent=1 // pred_check_branch
      %366 = sbr.rel (0) target = $region33
    $region32: #{a2_ratio_forward.1} parent=1 // pred_region
      %s368 = ssub.s32 32, 32
      %369 = vsyncadd [#allocation4], %s368
      %s371 = sshll.u32 [#allocation3], 4
      %s372 = int_to_ptr.vmem [resolvable:$true] %s371
      %374 = dma.vmem_to_hbm [thread:$0]  %s372, 32, %s7, [#allocation4]
    $region33: #{a2_ratio_forward.1} parent=1 // pred_fallthru
      _
    // Predicated region
    $region34: #{a2_ratio_forward.1} parent=1 // pred_check
      _
    $region35: #{a2_ratio_forward.1} parent=1 // pred_check_branch
      %376 = sbr.rel (0) target = $region37
    $region36: #{a2_ratio_forward.1} parent=1 // pred_region
      %377 = dma.done [#allocation4], 32
    $region37: #{a2_ratio_forward.1} parent=1 // pred_fallthru
      _
    %378 = vsyncpa [#allocation4], 1

</llo_original>
